<compile_context>
chip_gen: v7x
topology: tpu7x:2x2x1
jax: 0.10.0
libtpu: 0.0.40
codegen_flags: <defaults>
</compile_context>

<pallas_src>
import functools

import jax
import jax.numpy as jnp
from jax.experimental import pallas as pl
from jax.experimental.pallas import tpu as pltpu

EPS = 1e-5
_LANE = 128      # vreg lane width (last dim)
_SUBLANE = 8     # vreg sublane width (second-to-last dim)


def _round_up(x: int, m: int) -> int:
    return (x + m - 1) // m * m


def _fused_linear_relu_kernel(x_ref, w_ref, b_ref, o_ref):
    # MXU matmul with f32 accumulation, fused bias + ReLU epilogue (VPU).
    z = jnp.dot(x_ref[...], w_ref[...], preferred_element_type=jnp.float32)
    z = z + b_ref[...]                              # bias broadcast [1, Npad]
    o_ref[...] = jnp.maximum(z, 0.0).astype(o_ref.dtype)


@functools.partial(jax.jit, static_argnums=(3, 4))
def _forward_impl(params, buffers, x, tm, compute_dtype):
    # params  : (W [N,K], b [N], gamma [N], beta [N])
    # buffers : (running_mean [N], running_var [N], num_batches_tracked [])
    w, b, gamma, beta = params
    running_mean, running_var, _num_batches_tracked = buffers

    M, K = x.shape
    N = w.shape[0]

    # ---- fold eval-mode BN into the linear weight/bias (plain-JAX glue) ----
    scale = gamma * jax.lax.rsqrt(running_var + EPS)                   # [N]
    w_fold = (w * scale[:, None]).astype(jnp.float32)                  # [N, K]
    b_fold = ((b - running_mean) * scale + beta).astype(jnp.float32)   # [N]

    # ---- padding: lane-dense output width + flexible row tile ----
    n_pad = _round_up(N, _LANE)                       # lane-dense output width
    tile_m = min(tm, _round_up(M, _SUBLANE))          # big tile, but not > batch
    m_pad = _round_up(M, tile_m)                      # grid = (m_pad // tile_m,)

    cd = compute_dtype
    x_p = jnp.pad(x.astype(cd), ((0, m_pad - M), (0, 0)))
    wt_p = jnp.pad(jnp.transpose(w_fold).astype(cd), ((0, 0), (0, n_pad - N)))
    b_p = jnp.pad(b_fold[None, :], ((0, 0), (0, n_pad - N)))            # f32 bias

    grid = (m_pad // tile_m,)
    out = pl.pallas_call(
        _fused_linear_relu_kernel,
        out_shape=jax.ShapeDtypeStruct((m_pad, n_pad), x.dtype),
        grid_spec=pltpu.PrefetchScalarGridSpec(
            num_scalar_prefetch=0,
            grid=grid,
            in_specs=[
                pl.BlockSpec((tile_m, K), lambda i: (i, 0)),     # x row tile
                pl.BlockSpec((K, n_pad), lambda i: (0, 0)),      # folded W^T (resident)
                pl.BlockSpec((1, n_pad), lambda i: (0, 0)),      # folded bias (resident)
            ],
            out_specs=pl.BlockSpec((tile_m, n_pad), lambda i: (i, 0)),
        ),
        compiler_params=pltpu.CompilerParams(
            dimension_semantics=("parallel",)),
    )(x_p, wt_p, b_p)

    return out[:M, :N]


class FunctionalModuleWithBuffers:
    """JAX analog of the PyTorch wrapper: stateless forward taking params + buffers."""

    def __init__(self, param_names, buffer_names, tm=512, compute_dtype=jnp.float32):
        self.param_names = param_names
        self.buffer_names = buffer_names
        self.tm = tm                        # row tile (large => amortize grid overhead)
        self.compute_dtype = compute_dtype  # jnp.bfloat16 on v6e/v7x halves HBM traffic

    def forward(self, params, buffers, x):
        return _forward_impl(tuple(params), tuple(buffers), x,
                             self.tm, self.compute_dtype)

    def __call__(self, params, buffers, x):
        return self.forward(params, buffers, x)


def _reference(params, buffers, x):
    w, b, gamma, beta = params
    mean, var, _ = buffers
    z = x @ w.T + b
    y = (z - mean) / jnp.sqrt(var + EPS) * gamma + beta
    return jnp.maximum(y, 0.0)


if __name__ == "__main__":
    batch, in_features, out_features = 8, 32, 64

    key = jax.random.PRNGKey(0)
    k_x, k_w, k_b, k_g, k_beta, k_m, k_v = jax.random.split(key, 7)

    x = jax.random.normal(k_x, (batch, in_features), dtype=jnp.float32)

    # Deterministic synthetic params / buffers (shapes from the module layout).
    params = (
        jax.random.normal(k_w, (out_features, in_features), jnp.float32) * 0.1,  # linear.weight
        jax.random.normal(k_b, (out_features,), jnp.float32) * 0.1,              # linear.bias
        1.0 + 0.1 * jax.random.normal(k_g, (out_features,), jnp.float32),        # bn.weight
        0.1 * jax.random.normal(k_beta, (out_features,), jnp.float32),           # bn.bias
    )
    buffers = (
        0.1 * jax.random.normal(k_m, (out_features,), jnp.float32),              # running_mean
        1.0 + 0.1 * jax.random.uniform(k_v, (out_features,), jnp.float32),       # running_var
        jnp.array(1, jnp.int32),                                                 # num_batches_tracked
    )

    fmod = FunctionalModuleWithBuffers(
        param_names=["0.weight", "0.bias", "1.weight", "1.bias"],
        buffer_names=["1.running_mean", "1.running_var", "1.num_batches_tracked"],
    )

    out = fmod(params, buffers, x)
    out = jax.block_until_ready(out)

    ref = _reference(params, buffers, x)
    assert out.shape == (batch, out_features)
    assert jnp.max(jnp.abs(out - ref)) < 1e-4, "mismatch vs pure-JAX reference"

    print("KERNEL_OK")
</pallas_src>

<mosaic_0001>
module attributes {stable_mosaic.version = 11 : i64} {
  func.func @_fused_linear_relu_kernel(%arg0: i32, %arg1: memref<8x32xf32, #tpu.memory_space<vmem>>, %arg2: memref<32x128xf32, #tpu.memory_space<vmem>>, %arg3: memref<1x128xf32, #tpu.memory_space<vmem>>, %arg4: memref<8x128xf32, #tpu.memory_space<vmem>>) attributes {dimension_semantics = [#tpu.dimension_semantics<parallel>], iteration_bounds = array<i64: 1>, scalar_prefetch = 0 : i64, scratch_operands = 0 : i64, tpu.core_type = #tpu.core_type<tc>, window_params = [{transform_indices = @transform_0, window_bounds = array<i64: 8, 32>}, {pipeline_mode = #tpu.pipeline_mode<synchronous>, transform_indices = @transform_1, window_bounds = array<i64: 32, 128>}, {pipeline_mode = #tpu.pipeline_mode<synchronous>, transform_indices = @transform_2, window_bounds = array<i64: 1, 128>}, {transform_indices = @transform_3, window_bounds = array<i64: 8, 128>}]} {
    %c0 = arith.constant 0 : index
    %c0_0 = arith.constant 0 : index
    %0 = vector.load %arg1[%c0, %c0_0] : memref<8x32xf32, #tpu.memory_space<vmem>>, vector<8x32xf32>
    %c0_1 = arith.constant 0 : index
    %c0_2 = arith.constant 0 : index
    %1 = vector.load %arg2[%c0_1, %c0_2] : memref<32x128xf32, #tpu.memory_space<vmem>>, vector<32x128xf32>
    %cst = arith.constant dense<0.000000e+00> : vector<8x128xf32>
    %2 = tpu.matmul %0, %1, %cst {dimension_numbers = #tpu.dot_dimension_numbers<[1], [0], [0], [1], [0, 0, 1, 1], [], []>} : vector<8x32xf32>, vector<32x128xf32>, vector<8x128xf32> -> vector<8x128xf32>
    %c0_3 = arith.constant 0 : index
    %c0_4 = arith.constant 0 : index
    %3 = vector.load %arg3[%c0_3, %c0_4] : memref<1x128xf32, #tpu.memory_space<vmem>>, vector<1x128xf32>
    %4 = vector.broadcast %3 : vector<1x128xf32> to vector<8x128xf32>
    %5 = arith.addf %2, %4 : vector<8x128xf32>
    %cst_5 = arith.constant 0.000000e+00 : f32
    %6 = vector.broadcast %cst_5 : f32 to vector<8x128xf32>
    %7 = arith.maximumf %5, %6 : vector<8x128xf32>
    %c0_6 = arith.constant 0 : index
    %c0_7 = arith.constant 0 : index
    %8 = vector.load %arg4[%c0_6, %c0_7] : memref<8x128xf32, #tpu.memory_space<vmem>>, vector<8x128xf32>
    tpu.vector_store %arg4[%c0_6, %c0_7], %7 {strides = array<i32>} : memref<8x128xf32, #tpu.memory_space<vmem>>, vector<8x128xf32>,
    return
  }
  func.func @transform_0(%arg0: i32) -> (i32, i32) {
    %c0_i32 = arith.constant 0 : i32
    %c0_i32_0 = arith.constant 0 : i32
    return %arg0, %c0_i32 : i32, i32
  }
  func.func @transform_1(%arg0: i32) -> (i32, i32) {
    %c0_i32 = arith.constant 0 : i32
    %c0_i32_0 = arith.constant 0 : i32
    %c0_i32_1 = arith.constant 0 : i32
    return %c0_i32, %c0_i32_0 : i32, i32
  }
  func.func @transform_2(%arg0: i32) -> (i32, i32) {
    %c0_i32 = arith.constant 0 : i32
    %c0_i32_0 = arith.constant 0 : i32
    %c0_i32_1 = arith.constant 0 : i32
    return %c0_i32, %c0_i32_0 : i32, i32
  }
  func.func @transform_3(%arg0: i32) -> (i32, i32) {
    %c0_i32 = arith.constant 0 : i32
    %c0_i32_0 = arith.constant 0 : i32
    return %arg0, %c0_i32 : i32, i32
  }
}

</mosaic_0001>

<llo_original>
// kernel: _forward_impl.1
$region0: #{_forward_impl.1}
  #allocation0 [shape = 'u32[]', space=smem, size = 0x4, offset = 0x4, fixed_abs, tag = 'smem constant byte address 0x4 - core index']
  #allocation1 [shape = 'u32[144,128]{1,0:T(1,128)}', space=vmem, size = 0x12000, scoped, tag = 'internal scratch']
  %s0 = inlined_call_operand.vmem [shape: f32[8,32], index: 0, kind: input, shape index: {}]
  %s1 = inlined_call_operand.vmem [shape: f32[32,128], index: 1, kind: input, shape index: {}]
  %s2 = inlined_call_operand.vmem [shape: f32[1,128], index: 2, kind: input, shape index: {}]
  %s3 = inlined_call_operand.hbm [shape: f32[8,128], index: 3, kind: output, shape index: {}]
  %s4 = sld [smem:[#allocation0]]
  $region22: #{_forward_impl.1} parent=0
    _
  %s6 = ssub.s32 1, %s4
  %s7 = scalar_select 0, %s6, %s4
  $region1: #{_forward_impl.1} parent=0
    #allocation2 [shape = 'u8[4096]{0}', space=vmem, size = 0x1000, scoped, tag = 'output window, operand 0, single buffered']
    #allocation3 [shape = 's32[1]{0}', space=sflag, size = 0x4, scoped, tag = 'scoped memory for _forward_impl.1']
    %8 = vsyncpa [#allocation3], 0
    // Predicated region
    $region2: #{_forward_impl.1} parent=1 // pred_check
      _
    $region3: #{_forward_impl.1} parent=1 // pred_check_branch
      %10 = sbr.rel (0) target = $region5
    $region4: #{_forward_impl.1} parent=1 // pred_region
      _
    $region5: #{_forward_impl.1} parent=1 // pred_fallthru
      _
    // Predicated region
    $region6: #{_forward_impl.1} parent=1 // pred_check
      _
    $region7: #{_forward_impl.1} parent=1 // pred_check_branch
      %12 = sbr.rel (0) target = $region9
    $region8: #{_forward_impl.1} parent=1 // pred_region
      _
    $region9: #{_forward_impl.1} parent=1 // pred_fallthru
      _
    // Predicated region
    $region10: #{_forward_impl.1} parent=1 // pred_check
      _
    $region11: #{_forward_impl.1} parent=1 // pred_check_branch
      %14 = sbr.rel (0) target = $region13
    $region12: #{_forward_impl.1} parent=1 // pred_region
      _
    $region13: #{_forward_impl.1} parent=1 // pred_fallthru
      _
    %v15 = vld [vmem:[%s0] sm:$0xff]
    %v16 = vld [vmem:[%s1] sm:$0xff]
    %v17 = vld [vmem:[%s1 + $0x8] sm:$0xff]
    %v18 = vld [vmem:[%s1 + $0x10] sm:$0xff]
    %v19 = vld [vmem:[%s1 + $0x18] sm:$0xff]
    %v20 = vld [vmem:[%s2] sm:$0x1]
    %v22 = vlaneseq
    %v23 = vshrl.u32 %v22, 7
    %v24 = vsub.s32 0, %v23
    %v25 = vrot.slane %v20, %v24
    %vm27 = vcmask 261120
    %v29 = vsel %vm27, %v15, 0
    %31 = vmatprep.subr.mxu0 0.0
    %32 = vmatpush1.msra.mxu0 %v16
    %33 = vmatprep.subr.mxu0 0.0
    %34 = vmatpush1.msra.mxu0 %v17
    %35 = vmatprep.subr.mxu0 0.0
    %36 = vmatpush1.msra.mxu0 %v18
    %37 = vmatprep.subr.mxu0 0.0
    %38 = vmatpush1.msra.mxu0 %v19
    %39 = vmatprep.subr.mxu0 0.0
    %40 = vmatpush1.msra.mxu0 0.0
    %41 = vmatprep.subr.mxu0 0.0
    %42 = vmatpush1.msra.mxu0 0.0
    %43 = vmatprep.subr.mxu0 0.0
    %44 = vmatpush1.msra.mxu0 0.0
    %45 = vmatprep.subr.mxu0 0.0
    %46 = vmatpush1.msra.mxu0 0.0
    %47 = vmatprep.subr.mxu0 0.0
    %48 = vmatpush1.msra.mxu0 0.0
    %49 = vmatprep.subr.mxu0 0.0
    %50 = vmatpush1.msra.mxu0 0.0
    %51 = vmatprep.subr.mxu0 0.0
    %52 = vmatpush1.msra.mxu0 0.0
    %53 = vmatprep.subr.mxu0 0.0
    %54 = vmatpush1.msra.mxu0 0.0
    %55 = vmatprep.subr.mxu0 0.0
    %56 = vmatpush1.msra.mxu0 0.0
    %57 = vmatprep.subr.mxu0 0.0
    %58 = vmatpush1.msra.mxu0 0.0
    %59 = vmatprep.subr.mxu0 0.0
    %60 = vmatpush1.msra.mxu0 0.0
    %61 = vmatprep.subr.mxu0 0.0
    %62 = vmatpush1.msra.mxu0 0.0
    %63 = vmatprep.subr.mxu0 0.0
    %64 = vmatpush1.msra.mxu0 0.0
    %65 = vmatprep.subr.mxu0 0.0
    %66 = vmatpush1.msra.mxu0 0.0
    %67 = vmatprep.subr.mxu0 0.0
    %68 = vmatpush1.msra.mxu0 0.0
    %69 = vmatprep.subr.mxu0 0.0
    %70 = vmatpush1.msra.mxu0 0.0
    %71 = vmatprep.subr.mxu0 0.0
    %72 = vmatpush1.msra.mxu0 0.0
    %73 = vmatprep.subr.mxu0 0.0
    %74 = vmatpush1.msra.mxu0 0.0
    %75 = vmatprep.subr.mxu0 0.0
    %76 = vmatpush1.msra.mxu0 0.0
    %77 = vmatprep.subr.mxu0 0.0
    %78 = vmatpush1.msra.mxu0 0.0
    %79 = vmatprep.subr.mxu0 0.0
    %80 = vmatpush1.msra.mxu0 0.0
    %81 = vmatprep.subr.mxu0 0.0
    %82 = vmatpush1.msra.mxu0 0.0
    %83 = vmatprep.subr.mxu0 0.0
    %84 = vmatpush1.msra.mxu0 0.0
    %85 = vmatprep.subr.mxu0 0.0
    %86 = vmatpush1.msra.mxu0 0.0
    %87 = vmatprep.subr.mxu0 0.0
    %88 = vmatpush1.msra.mxu0 0.0
    %89 = vmatprep.subr.mxu0 0.0
    %90 = vmatpush1.msra.mxu0 0.0
    %91 = vmatprep.subr.mxu0 0.0
    %92 = vmatpush1.msra.mxu0 0.0
    %93 = vmatprep.subr.mxu0 0.0
    %94 = vmatpush1.msra.mxu0 0.0
    %95 = vmatprep.mubr.f32.mxu0 0.0
    %96 = vmatmul.mubr.f32.gmra.mrb[0].mxu0 %v29
    %v97 = vpop.f32.mrb[0].mxu0
    %v98 = vadd.f32 %v25, %v97
    %v99 = vpop.f32.mrb[0].mxu0
    %100 = vdwg.mxu0
    %v101 = vmax.f32 %v98, 0.0
    %102 = vst [vmem:[#allocation2] sm:$0xff] %v101
    // Predicated region
    $region14: #{_forward_impl.1} parent=1 // pred_check
      _
    $region15: #{_forward_impl.1} parent=1 // pred_check_branch
      %104 = sbr.rel (0) target = $region17
    $region16: #{_forward_impl.1} parent=1 // pred_region
      %s106 = ssub.s32 128, 128
      %107 = vsyncadd [#allocation3], %s106
      %s109 = sshll.u32 [#allocation2], 4
      %s110 = int_to_ptr.vmem [resolvable:$true] %s109
      %112 = dma.vmem_to_hbm [thread:$0]  %s110, 128, %s3, [#allocation3]
    $region17: #{_forward_impl.1} parent=1 // pred_fallthru
      _
    // Predicated region
    $region18: #{_forward_impl.1} parent=1 // pred_check
      _
    $region19: #{_forward_impl.1} parent=1 // pred_check_branch
      %114 = sbr.rel (0) target = $region21
    $region20: #{_forward_impl.1} parent=1 // pred_region
      %115 = dma.done [#allocation3], 128
    $region21: #{_forward_impl.1} parent=1 // pred_fallthru
      _
    %116 = vsyncpa [#allocation3], 1

</llo_original>
